<compile_context>
chip_gen: v5e
topology: v5e:2x2
jax: 0.10.0
libtpu: 0.0.40
codegen_flags: <defaults>
</compile_context>

<pallas_src>
import numpy as np
import jax
import jax.numpy as jnp
from jax.experimental import pallas as pl
from jax.experimental.pallas import tpu as pltpu


def rnn_kernel(x_ref, w1h_ref, w1x_ref, b1_ref, w2_ref, b2_ref,
               out_ref, hfinal_ref):
    """Single-invocation RNN forward.

    x_ref      : (B*S, F)  batch-major flattened inputs (row = b*S + t)
    w1h_ref    : (H, H)    hidden -> hidden weight (transposed: [k, j] = W1[j, k])
    w1x_ref    : (F, H)    input  -> hidden weight (transposed)
    b1_ref     : (1, H)
    w2_ref     : (H, O)    hidden -> output weight (transposed)
    b2_ref     : (1, O)
    out_ref    : (B*S, O)  batch-major flattened outputs (row = b*S + t)
    hfinal_ref : (B, H)    final hidden state
    """
    BS, F = x_ref.shape
    H = w1h_ref.shape[0]
    O = w2_ref.shape[1]
    B = hfinal_ref.shape[0]
    S = BS // B

    # ---- Prologue: hoisted input projection, one MXU-friendly matmul. ----
    xproj2d = (jnp.dot(x_ref[...], w1x_ref[...],
                       preferred_element_type=jnp.float32)
               + b1_ref[...])                           # (B*S, H)
    xproj = xproj2d.reshape(B, S, H)                    # layout no-op split

    # Loop-invariant rows of the recurrent weight, hoisted once.
    w1h = w1h_ref[...]                                  # (H, H)
    w1h_rows = [w1h[k:k + 1, :] for k in range(H)]      # each (1, H)

    # ---- Recurrence: fully unrolled (S small & static).  Only H VPU
    # broadcast-FMAs + one EUP tanh per step are on the serial path; the MXU
    # is not touched inside the loop. ----
    h = jnp.zeros((B, H), jnp.float32)
    hs = []
    for t in range(S):
        pre = xproj[:, t, :]                            # (B, H)
        for k in range(H):
            pre = pre + h[:, k:k + 1] * w1h_rows[k]     # VPU broadcast-mul-add
        h = jnp.tanh(pre)                               # EUP
        hs.append(h)

    # Per-step hidden states stay as values (no VMEM scratch round-trip).
    h_all = jnp.stack(hs, axis=1).reshape(BS, H)        # (B*S, H) batch-major

    # ---- Epilogue: hoisted output projection, one matmul + one wide store. --
    out_ref[...] = (jnp.dot(h_all, w2_ref[...],
                            preferred_element_type=jnp.float32)
                    + b2_ref[...]).astype(out_ref.dtype)
    hfinal_ref[...] = h.astype(hfinal_ref.dtype)        # written once


def my_rnn_forward(x, w1, b1, w2, b2):
    """x: (batch, seq, in_features) f32.  Returns (output, curr_hidden_state)
    with shapes (batch, seq, out_features) and (1, batch, hidden_size),
    matching the PyTorch module."""
    B, S, F = x.shape
    O, H = w2.shape

    # Contiguous batch-major flatten: pure bitcast, no data movement (the
    # torch permute(1,0,2) is folded into the kernel's row indexing instead).
    x2d = x.reshape(B * S, F)

    # Split linear1 weight: first H columns act on hidden, last F on input.
    w1h_t = jnp.transpose(w1[:, :H])            # (H, H)
    w1x_t = jnp.transpose(w1[:, H:])            # (F, H)
    w2_t = jnp.transpose(w2)                    # (H, O)
    b1_2d = b1.reshape(1, H)
    b2_2d = b2.reshape(1, O)

    vmem_spec = pl.BlockSpec(memory_space=pltpu.MemorySpace.VMEM)

    flops = 2 * S * B * (H * (H + F) + H * O)
    bytes_accessed = 4 * (S * B * F + S * B * O + H * (H + F) + H
                          + H * O + O + B * H)

    out2d, h_final = pl.pallas_call(
        rnn_kernel,
        out_shape=(
            jax.ShapeDtypeStruct((B * S, O), jnp.float32),
            jax.ShapeDtypeStruct((B, H), jnp.float32),
        ),
        in_specs=[vmem_spec] * 6,
        out_specs=(vmem_spec, vmem_spec),
        cost_estimate=pl.CostEstimate(
            flops=flops,
            transcendentals=S * B * H,
            bytes_accessed=bytes_accessed),
    )(x2d, w1h_t, w1x_t, b1_2d, w2_t, b2_2d)

    output = out2d.reshape(B, S, O)             # bitcast reshape, no transpose
    curr_hidden_state = h_final[None, :, :]     # (1, B, H)
    return output, curr_hidden_state


def reference_forward(x, w1, b1, w2, b2):
    """Pure-JAX reference mirroring the PyTorch forward."""
    B, S, F = x.shape
    H = w2.shape[1]
    x_tm = jnp.transpose(x, (1, 0, 2))          # (S, B, F)
    h = jnp.zeros((B, H), jnp.float32)
    outs = []
    for t in range(S):
        cat = jnp.concatenate([h, x_tm[t]], axis=-1)     # (B, H+F)
        h = jnp.tanh(cat @ w1.T + b1)
        outs.append(h @ w2.T + b2)
    out_tm = jnp.stack(outs, axis=0)
    return jnp.transpose(out_tm, (1, 0, 2)), h[None]


if __name__ == "__main__":
    # TODO(synk): the PyTorch forward's debug print() calls have no kernel
    # equivalent and are intentionally omitted (no effect on outputs).
    in_features, hidden_size, out_features = 6, 4, 2
    batch, seq = 2, 8

    key = jax.random.PRNGKey(0)
    k_x, k_w1, k_b1, k_w2, k_b2 = jax.random.split(key, 5)

    # Deterministic parameter init (PyTorch-style uniform +-1/sqrt(fan_in)).
    fan1 = in_features + hidden_size
    w1 = jax.random.uniform(k_w1, (hidden_size, fan1), jnp.float32,
                            -1.0 / np.sqrt(fan1), 1.0 / np.sqrt(fan1))
    b1 = jax.random.uniform(k_b1, (hidden_size,), jnp.float32,
                            -1.0 / np.sqrt(fan1), 1.0 / np.sqrt(fan1))
    w2 = jax.random.uniform(k_w2, (out_features, hidden_size), jnp.float32,
                            -1.0 / np.sqrt(hidden_size), 1.0 / np.sqrt(hidden_size))
    b2 = jax.random.uniform(k_b2, (out_features,), jnp.float32,
                            -1.0 / np.sqrt(hidden_size), 1.0 / np.sqrt(hidden_size))

    x = jax.random.normal(k_x, (batch, seq, in_features), jnp.float32)

    # Jit the whole wrapper: one dispatch for weight prep + kernel + reshapes.
    fwd = jax.jit(my_rnn_forward)
    out, h_last = fwd(x, w1, b1, w2, b2)
    out = jax.block_until_ready(out)
    h_last = jax.block_until_ready(h_last)

    ref_out, ref_h = reference_forward(x, w1, b1, w2, b2)
    assert out.shape == (batch, seq, out_features)
    assert h_last.shape == (1, batch, hidden_size)
    np.testing.assert_allclose(np.asarray(out), np.asarray(ref_out),
                               rtol=1e-5, atol=1e-5)
    np.testing.assert_allclose(np.asarray(h_last), np.asarray(ref_h),
                               rtol=1e-5, atol=1e-5)

    print("KERNEL_OK")
</pallas_src>

<mosaic_0001>
module attributes {stable_mosaic.version = 11 : i64} {
  func.func @rnn_kernel(%arg0: memref<16x6xf32, #tpu.memory_space<vmem>>, %arg1: memref<4x4xf32, #tpu.memory_space<vmem>>, %arg2: memref<6x4xf32, #tpu.memory_space<vmem>>, %arg3: memref<1x4xf32, #tpu.memory_space<vmem>>, %arg4: memref<4x2xf32, #tpu.memory_space<vmem>>, %arg5: memref<1x2xf32, #tpu.memory_space<vmem>>, %arg6: memref<16x2xf32, #tpu.memory_space<vmem>>, %arg7: memref<2x4xf32, #tpu.memory_space<vmem>>) attributes {dimension_semantics = [], scalar_prefetch = 0 : i64, scratch_operands = 0 : i64, tpu.core_type = #tpu.core_type<tc>} {
    %c0 = arith.constant 0 : index
    %c0_0 = arith.constant 0 : index
    %0 = vector.load %arg0[%c0, %c0_0] : memref<16x6xf32, #tpu.memory_space<vmem>>, vector<16x6xf32>
    %c0_1 = arith.constant 0 : index
    %c0_2 = arith.constant 0 : index
    %1 = vector.load %arg2[%c0_1, %c0_2] : memref<6x4xf32, #tpu.memory_space<vmem>>, vector<6x4xf32>
    %cst = arith.constant dense<0.000000e+00> : vector<16x4xf32>
    %2 = tpu.matmul %0, %1, %cst {dimension_numbers = #tpu.dot_dimension_numbers<[1], [0], [0], [1], [0, 0, 1, 1], [], []>} : vector<16x6xf32>, vector<6x4xf32>, vector<16x4xf32> -> vector<16x4xf32>
    %c0_3 = arith.constant 0 : index
    %c0_4 = arith.constant 0 : index
    %3 = vector.load %arg3[%c0_3, %c0_4] : memref<1x4xf32, #tpu.memory_space<vmem>>, vector<1x4xf32>
    %4 = vector.broadcast %3 : vector<1x4xf32> to vector<16x4xf32>
    %5 = arith.addf %2, %4 : vector<16x4xf32>
    %6 = vector.shape_cast %5 : vector<16x4xf32> to vector<2x8x4xf32>
    %c0_5 = arith.constant 0 : index
    %c0_6 = arith.constant 0 : index
    %7 = vector.load %arg1[%c0_5, %c0_6] : memref<4x4xf32, #tpu.memory_space<vmem>>, vector<4x4xf32>
    %8 = vector.extract_strided_slice %7 {offsets = [0, 0], sizes = [1, 4], strides = [1, 1]} : vector<4x4xf32> to vector<1x4xf32>
    %9 = vector.extract_strided_slice %7 {offsets = [1, 0], sizes = [1, 4], strides = [1, 1]} : vector<4x4xf32> to vector<1x4xf32>
    %10 = vector.extract_strided_slice %7 {offsets = [2, 0], sizes = [1, 4], strides = [1, 1]} : vector<4x4xf32> to vector<1x4xf32>
    %11 = vector.extract_strided_slice %7 {offsets = [3, 0], sizes = [1, 4], strides = [1, 1]} : vector<4x4xf32> to vector<1x4xf32>
    %cst_7 = arith.constant 0.000000e+00 : f32
    %12 = vector.broadcast %cst_7 : f32 to vector<2x4xf32>
    %13 = vector.extract_strided_slice %6 {offsets = [0, 0, 0], sizes = [2, 1, 4], strides = [1, 1, 1]} : vector<2x8x4xf32> to vector<2x1x4xf32>
    %14 = vector.shape_cast %13 : vector<2x1x4xf32> to vector<2x4xf32>
    %15 = vector.extract_strided_slice %12 {offsets = [0, 0], sizes = [2, 1], strides = [1, 1]} : vector<2x4xf32> to vector<2x1xf32>
    %16 = vector.broadcast %15 : vector<2x1xf32> to vector<2x4xf32>
    %17 = vector.broadcast %8 : vector<1x4xf32> to vector<2x4xf32>
    %18 = arith.mulf %16, %17 : vector<2x4xf32>
    %19 = arith.addf %14, %18 : vector<2x4xf32>
    %20 = vector.extract_strided_slice %12 {offsets = [0, 1], sizes = [2, 1], strides = [1, 1]} : vector<2x4xf32> to vector<2x1xf32>
    %21 = vector.broadcast %20 : vector<2x1xf32> to vector<2x4xf32>
    %22 = vector.broadcast %9 : vector<1x4xf32> to vector<2x4xf32>
    %23 = arith.mulf %21, %22 : vector<2x4xf32>
    %24 = arith.addf %19, %23 : vector<2x4xf32>
    %25 = vector.extract_strided_slice %12 {offsets = [0, 2], sizes = [2, 1], strides = [1, 1]} : vector<2x4xf32> to vector<2x1xf32>
    %26 = vector.broadcast %25 : vector<2x1xf32> to vector<2x4xf32>
    %27 = vector.broadcast %10 : vector<1x4xf32> to vector<2x4xf32>
    %28 = arith.mulf %26, %27 : vector<2x4xf32>
    %29 = arith.addf %24, %28 : vector<2x4xf32>
    %30 = vector.extract_strided_slice %12 {offsets = [0, 3], sizes = [2, 1], strides = [1, 1]} : vector<2x4xf32> to vector<2x1xf32>
    %31 = vector.broadcast %30 : vector<2x1xf32> to vector<2x4xf32>
    %32 = vector.broadcast %11 : vector<1x4xf32> to vector<2x4xf32>
    %33 = arith.mulf %31, %32 : vector<2x4xf32>
    %34 = arith.addf %29, %33 : vector<2x4xf32>
    %35 = math.tanh %34 : vector<2x4xf32>
    %36 = vector.extract_strided_slice %6 {offsets = [0, 1, 0], sizes = [2, 1, 4], strides = [1, 1, 1]} : vector<2x8x4xf32> to vector<2x1x4xf32>
    %37 = vector.shape_cast %36 : vector<2x1x4xf32> to vector<2x4xf32>
    %38 = vector.extract_strided_slice %35 {offsets = [0, 0], sizes = [2, 1], strides = [1, 1]} : vector<2x4xf32> to vector<2x1xf32>
    %39 = vector.broadcast %38 : vector<2x1xf32> to vector<2x4xf32>
    %40 = vector.broadcast %8 : vector<1x4xf32> to vector<2x4xf32>
    %41 = arith.mulf %39, %40 : vector<2x4xf32>
    %42 = arith.addf %37, %41 : vector<2x4xf32>
    %43 = vector.extract_strided_slice %35 {offsets = [0, 1], sizes = [2, 1], strides = [1, 1]} : vector<2x4xf32> to vector<2x1xf32>
    %44 = vector.broadcast %43 : vector<2x1xf32> to vector<2x4xf32>
    %45 = vector.broadcast %9 : vector<1x4xf32> to vector<2x4xf32>
    %46 = arith.mulf %44, %45 : vector<2x4xf32>
    %47 = arith.addf %42, %46 : vector<2x4xf32>
    %48 = vector.extract_strided_slice %35 {offsets = [0, 2], sizes = [2, 1], strides = [1, 1]} : vector<2x4xf32> to vector<2x1xf32>
    %49 = vector.broadcast %48 : vector<2x1xf32> to vector<2x4xf32>
    %50 = vector.broadcast %10 : vector<1x4xf32> to vector<2x4xf32>
    %51 = arith.mulf %49, %50 : vector<2x4xf32>
    %52 = arith.addf %47, %51 : vector<2x4xf32>
    %53 = vector.extract_strided_slice %35 {offsets = [0, 3], sizes = [2, 1], strides = [1, 1]} : vector<2x4xf32> to vector<2x1xf32>
    %54 = vector.broadcast %53 : vector<2x1xf32> to vector<2x4xf32>
    %55 = vector.broadcast %11 : vector<1x4xf32> to vector<2x4xf32>
    %56 = arith.mulf %54, %55 : vector<2x4xf32>
    %57 = arith.addf %52, %56 : vector<2x4xf32>
    %58 = math.tanh %57 : vector<2x4xf32>
    %59 = vector.extract_strided_slice %6 {offsets = [0, 2, 0], sizes = [2, 1, 4], strides = [1, 1, 1]} : vector<2x8x4xf32> to vector<2x1x4xf32>
    %60 = vector.shape_cast %59 : vector<2x1x4xf32> to vector<2x4xf32>
    %61 = vector.extract_strided_slice %58 {offsets = [0, 0], sizes = [2, 1], strides = [1, 1]} : vector<2x4xf32> to vector<2x1xf32>
    %62 = vector.broadcast %61 : vector<2x1xf32> to vector<2x4xf32>
    %63 = vector.broadcast %8 : vector<1x4xf32> to vector<2x4xf32>
    %64 = arith.mulf %62, %63 : vector<2x4xf32>
    %65 = arith.addf %60, %64 : vector<2x4xf32>
    %66 = vector.extract_strided_slice %58 {offsets = [0, 1], sizes = [2, 1], strides = [1, 1]} : vector<2x4xf32> to vector<2x1xf32>
    %67 = vector.broadcast %66 : vector<2x1xf32> to vector<2x4xf32>
    %68 = vector.broadcast %9 : vector<1x4xf32> to vector<2x4xf32>
    %69 = arith.mulf %67, %68 : vector<2x4xf32>
    %70 = arith.addf %65, %69 : vector<2x4xf32>
    %71 = vector.extract_strided_slice %58 {offsets = [0, 2], sizes = [2, 1], strides = [1, 1]} : vector<2x4xf32> to vector<2x1xf32>
    %72 = vector.broadcast %71 : vector<2x1xf32> to vector<2x4xf32>
    %73 = vector.broadcast %10 : vector<1x4xf32> to vector<2x4xf32>
    %74 = arith.mulf %72, %73 : vector<2x4xf32>
    %75 = arith.addf %70, %74 : vector<2x4xf32>
    %76 = vector.extract_strided_slice %58 {offsets = [0, 3], sizes = [2, 1], strides = [1, 1]} : vector<2x4xf32> to vector<2x1xf32>
    %77 = vector.broadcast %76 : vector<2x1xf32> to vector<2x4xf32>
    %78 = vector.broadcast %11 : vector<1x4xf32> to vector<2x4xf32>
    %79 = arith.mulf %77, %78 : vector<2x4xf32>
    %80 = arith.addf %75, %79 : vector<2x4xf32>
    %81 = math.tanh %80 : vector<2x4xf32>
    %82 = vector.extract_strided_slice %6 {offsets = [0, 3, 0], sizes = [2, 1, 4], strides = [1, 1, 1]} : vector<2x8x4xf32> to vector<2x1x4xf32>
    %83 = vector.shape_cast %82 : vector<2x1x4xf32> to vector<2x4xf32>
    %84 = vector.extract_strided_slice %81 {offsets = [0, 0], sizes = [2, 1], strides = [1, 1]} : vector<2x4xf32> to vector<2x1xf32>
    %85 = vector.broadcast %84 : vector<2x1xf32> to vector<2x4xf32>
    %86 = vector.broadcast %8 : vector<1x4xf32> to vector<2x4xf32>
    %87 = arith.mulf %85, %86 : vector<2x4xf32>
    %88 = arith.addf %83, %87 : vector<2x4xf32>
    %89 = vector.extract_strided_slice %81 {offsets = [0, 1], sizes = [2, 1], strides = [1, 1]} : vector<2x4xf32> to vector<2x1xf32>
    %90 = vector.broadcast %89 : vector<2x1xf32> to vector<2x4xf32>
    %91 = vector.broadcast %9 : vector<1x4xf32> to vector<2x4xf32>
    %92 = arith.mulf %90, %91 : vector<2x4xf32>
    %93 = arith.addf %88, %92 : vector<2x4xf32>
    %94 = vector.extract_strided_slice %81 {offsets = [0, 2], sizes = [2, 1], strides = [1, 1]} : vector<2x4xf32> to vector<2x1xf32>
    %95 = vector.broadcast %94 : vector<2x1xf32> to vector<2x4xf32>
    %96 = vector.broadcast %10 : vector<1x4xf32> to vector<2x4xf32>
    %97 = arith.mulf %95, %96 : vector<2x4xf32>
    %98 = arith.addf %93, %97 : vector<2x4xf32>
    %99 = vector.extract_strided_slice %81 {offsets = [0, 3], sizes = [2, 1], strides = [1, 1]} : vector<2x4xf32> to vector<2x1xf32>
    %100 = vector.broadcast %99 : vector<2x1xf32> to vector<2x4xf32>
    %101 = vector.broadcast %11 : vector<1x4xf32> to vector<2x4xf32>
    %102 = arith.mulf %100, %101 : vector<2x4xf32>
    %103 = arith.addf %98, %102 : vector<2x4xf32>
    %104 = math.tanh %103 : vector<2x4xf32>
    %105 = vector.extract_strided_slice %6 {offsets = [0, 4, 0], sizes = [2, 1, 4], strides = [1, 1, 1]} : vector<2x8x4xf32> to vector<2x1x4xf32>
    %106 = vector.shape_cast %105 : vector<2x1x4xf32> to vector<2x4xf32>
    %107 = vector.extract_strided_slice %104 {offsets = [0, 0], sizes = [2, 1], strides = [1, 1]} : vector<2x4xf32> to vector<2x1xf32>
    %108 = vector.broadcast %107 : vector<2x1xf32> to vector<2x4xf32>
    %109 = vector.broadcast %8 : vector<1x4xf32> to vector<2x4xf32>
    %110 = arith.mulf %108, %109 : vector<2x4xf32>
    %111 = arith.addf %106, %110 : vector<2x4xf32>
    %112 = vector.extract_strided_slice %104 {offsets = [0, 1], sizes = [2, 1], strides = [1, 1]} : vector<2x4xf32> to vector<2x1xf32>
    %113 = vector.broadcast %112 : vector<2x1xf32> to vector<2x4xf32>
    %114 = vector.broadcast %9 : vector<1x4xf32> to vector<2x4xf32>
    %115 = arith.mulf %113, %114 : vector<2x4xf32>
    %116 = arith.addf %111, %115 : vector<2x4xf32>
    %117 = vector.extract_strided_slice %104 {offsets = [0, 2], sizes = [2, 1], strides = [1, 1]} : vector<2x4xf32> to vector<2x1xf32>
    %118 = vector.broadcast %117 : vector<2x1xf32> to vector<2x4xf32>
    %119 = vector.broadcast %10 : vector<1x4xf32> to vector<2x4xf32>
    %120 = arith.mulf %118, %119 : vector<2x4xf32>
    %121 = arith.addf %116, %120 : vector<2x4xf32>
    %122 = vector.extract_strided_slice %104 {offsets = [0, 3], sizes = [2, 1], strides = [1, 1]} : vector<2x4xf32> to vector<2x1xf32>
    %123 = vector.broadcast %122 : vector<2x1xf32> to vector<2x4xf32>
    %124 = vector.broadcast %11 : vector<1x4xf32> to vector<2x4xf32>
    %125 = arith.mulf %123, %124 : vector<2x4xf32>
    %126 = arith.addf %121, %125 : vector<2x4xf32>
    %127 = math.tanh %126 : vector<2x4xf32>
    %128 = vector.extract_strided_slice %6 {offsets = [0, 5, 0], sizes = [2, 1, 4], strides = [1, 1, 1]} : vector<2x8x4xf32> to vector<2x1x4xf32>
    %129 = vector.shape_cast %128 : vector<2x1x4xf32> to vector<2x4xf32>
    %130 = vector.extract_strided_slice %127 {offsets = [0, 0], sizes = [2, 1], strides = [1, 1]} : vector<2x4xf32> to vector<2x1xf32>
    %131 = vector.broadcast %130 : vector<2x1xf32> to vector<2x4xf32>
    %132 = vector.broadcast %8 : vector<1x4xf32> to vector<2x4xf32>
    %133 = arith.mulf %131, %132 : vector<2x4xf32>
    %134 = arith.addf %129, %133 : vector<2x4xf32>
    %135 = vector.extract_strided_slice %127 {offsets = [0, 1], sizes = [2, 1], strides = [1, 1]} : vector<2x4xf32> to vector<2x1xf32>
    %136 = vector.broadcast %135 : vector<2x1xf32> to vector<2x4xf32>
    %137 = vector.broadcast %9 : vector<1x4xf32> to vector<2x4xf32>
    %138 = arith.mulf %136, %137 : vector<2x4xf32>
    %139 = arith.addf %134, %138 : vector<2x4xf32>
    %140 = vector.extract_strided_slice %127 {offsets = [0, 2], sizes = [2, 1], strides = [1, 1]} : vector<2x4xf32> to vector<2x1xf32>
    %141 = vector.broadcast %140 : vector<2x1xf32> to vector<2x4xf32>
    %142 = vector.broadcast %10 : vector<1x4xf32> to vector<2x4xf32>
    %143 = arith.mulf %141, %142 : vector<2x4xf32>
    %144 = arith.addf %139, %143 : vector<2x4xf32>
    %145 = vector.extract_strided_slice %127 {offsets = [0, 3], sizes = [2, 1], strides = [1, 1]} : vector<2x4xf32> to vector<2x1xf32>
    %146 = vector.broadcast %145 : vector<2x1xf32> to vector<2x4xf32>
    %147 = vector.broadcast %11 : vector<1x4xf32> to vector<2x4xf32>
    %148 = arith.mulf %146, %147 : vector<2x4xf32>
    %149 = arith.addf %144, %148 : vector<2x4xf32>
    %150 = math.tanh %149 : vector<2x4xf32>
    %151 = vector.extract_strided_slice %6 {offsets = [0, 6, 0], sizes = [2, 1, 4], strides = [1, 1, 1]} : vector<2x8x4xf32> to vector<2x1x4xf32>
    %152 = vector.shape_cast %151 : vector<2x1x4xf32> to vector<2x4xf32>
    %153 = vector.extract_strided_slice %150 {offsets = [0, 0], sizes = [2, 1], strides = [1, 1]} : vector<2x4xf32> to vector<2x1xf32>
    %154 = vector.broadcast %153 : vector<2x1xf32> to vector<2x4xf32>
    %155 = vector.broadcast %8 : vector<1x4xf32> to vector<2x4xf32>
    %156 = arith.mulf %154, %155 : vector<2x4xf32>
    %157 = arith.addf %152, %156 : vector<2x4xf32>
    %158 = vector.extract_strided_slice %150 {offsets = [0, 1], sizes = [2, 1], strides = [1, 1]} : vector<2x4xf32> to vector<2x1xf32>
    %159 = vector.broadcast %158 : vector<2x1xf32> to vector<2x4xf32>
    %160 = vector.broadcast %9 : vector<1x4xf32> to vector<2x4xf32>
    %161 = arith.mulf %159, %160 : vector<2x4xf32>
    %162 = arith.addf %157, %161 : vector<2x4xf32>
    %163 = vector.extract_strided_slice %150 {offsets = [0, 2], sizes = [2, 1], strides = [1, 1]} : vector<2x4xf32> to vector<2x1xf32>
    %164 = vector.broadcast %163 : vector<2x1xf32> to vector<2x4xf32>
    %165 = vector.broadcast %10 : vector<1x4xf32> to vector<2x4xf32>
    %166 = arith.mulf %164, %165 : vector<2x4xf32>
    %167 = arith.addf %162, %166 : vector<2x4xf32>
    %168 = vector.extract_strided_slice %150 {offsets = [0, 3], sizes = [2, 1], strides = [1, 1]} : vector<2x4xf32> to vector<2x1xf32>
    %169 = vector.broadcast %168 : vector<2x1xf32> to vector<2x4xf32>
    %170 = vector.broadcast %11 : vector<1x4xf32> to vector<2x4xf32>
    %171 = arith.mulf %169, %170 : vector<2x4xf32>
    %172 = arith.addf %167, %171 : vector<2x4xf32>
    %173 = math.tanh %172 : vector<2x4xf32>
    %174 = vector.extract_strided_slice %6 {offsets = [0, 7, 0], sizes = [2, 1, 4], strides = [1, 1, 1]} : vector<2x8x4xf32> to vector<2x1x4xf32>
    %175 = vector.shape_cast %174 : vector<2x1x4xf32> to vector<2x4xf32>
    %176 = vector.extract_strided_slice %173 {offsets = [0, 0], sizes = [2, 1], strides = [1, 1]} : vector<2x4xf32> to vector<2x1xf32>
    %177 = vector.broadcast %176 : vector<2x1xf32> to vector<2x4xf32>
    %178 = vector.broadcast %8 : vector<1x4xf32> to vector<2x4xf32>
    %179 = arith.mulf %177, %178 : vector<2x4xf32>
    %180 = arith.addf %175, %179 : vector<2x4xf32>
    %181 = vector.extract_strided_slice %173 {offsets = [0, 1], sizes = [2, 1], strides = [1, 1]} : vector<2x4xf32> to vector<2x1xf32>
    %182 = vector.broadcast %181 : vector<2x1xf32> to vector<2x4xf32>
    %183 = vector.broadcast %9 : vector<1x4xf32> to vector<2x4xf32>
    %184 = arith.mulf %182, %183 : vector<2x4xf32>
    %185 = arith.addf %180, %184 : vector<2x4xf32>
    %186 = vector.extract_strided_slice %173 {offsets = [0, 2], sizes = [2, 1], strides = [1, 1]} : vector<2x4xf32> to vector<2x1xf32>
    %187 = vector.broadcast %186 : vector<2x1xf32> to vector<2x4xf32>
    %188 = vector.broadcast %10 : vector<1x4xf32> to vector<2x4xf32>
    %189 = arith.mulf %187, %188 : vector<2x4xf32>
    %190 = arith.addf %185, %189 : vector<2x4xf32>
    %191 = vector.extract_strided_slice %173 {offsets = [0, 3], sizes = [2, 1], strides = [1, 1]} : vector<2x4xf32> to vector<2x1xf32>
    %192 = vector.broadcast %191 : vector<2x1xf32> to vector<2x4xf32>
    %193 = vector.broadcast %11 : vector<1x4xf32> to vector<2x4xf32>
    %194 = arith.mulf %192, %193 : vector<2x4xf32>
    %195 = arith.addf %190, %194 : vector<2x4xf32>
    %196 = math.tanh %195 : vector<2x4xf32>
    %197 = vector.shape_cast %35 : vector<2x4xf32> to vector<2x1x4xf32>
    %198 = vector.shape_cast %58 : vector<2x4xf32> to vector<2x1x4xf32>
    %199 = vector.shape_cast %81 : vector<2x4xf32> to vector<2x1x4xf32>
    %200 = vector.shape_cast %104 : vector<2x4xf32> to vector<2x1x4xf32>
    %201 = vector.shape_cast %127 : vector<2x4xf32> to vector<2x1x4xf32>
    %202 = vector.shape_cast %150 : vector<2x4xf32> to vector<2x1x4xf32>
    %203 = vector.shape_cast %173 : vector<2x4xf32> to vector<2x1x4xf32>
    %204 = vector.shape_cast %196 : vector<2x4xf32> to vector<2x1x4xf32>
    %205 = tpu.concatenate %197, %198, %199, %200, %201, %202, %203, %204 in 1 : vector<2x1x4xf32>, vector<2x1x4xf32>, vector<2x1x4xf32>, vector<2x1x4xf32>, vector<2x1x4xf32>, vector<2x1x4xf32>, vector<2x1x4xf32>, vector<2x1x4xf32> -> vector<2x8x4xf32>
    %206 = vector.shape_cast %205 : vector<2x8x4xf32> to vector<16x4xf32>
    %c0_8 = arith.constant 0 : index
    %c0_9 = arith.constant 0 : index
    %207 = vector.load %arg4[%c0_8, %c0_9] : memref<4x2xf32, #tpu.memory_space<vmem>>, vector<4x2xf32>
    %cst_10 = arith.constant dense<0.000000e+00> : vector<16x2xf32>
    %208 = tpu.matmul %206, %207, %cst_10 {dimension_numbers = #tpu.dot_dimension_numbers<[1], [0], [0], [1], [0, 0, 1, 1], [], []>} : vector<16x4xf32>, vector<4x2xf32>, vector<16x2xf32> -> vector<16x2xf32>
    %c0_11 = arith.constant 0 : index
    %c0_12 = arith.constant 0 : index
    %209 = vector.load %arg5[%c0_11, %c0_12] : memref<1x2xf32, #tpu.memory_space<vmem>>, vector<1x2xf32>
    %210 = vector.broadcast %209 : vector<1x2xf32> to vector<16x2xf32>
    %211 = arith.addf %208, %210 : vector<16x2xf32>
    %c0_13 = arith.constant 0 : index
    %c0_14 = arith.constant 0 : index
    %212 = vector.load %arg6[%c0_13, %c0_14] : memref<16x2xf32, #tpu.memory_space<vmem>>, vector<16x2xf32>
    tpu.vector_store %arg6[%c0_13, %c0_14], %211 {strides = array<i32>} : memref<16x2xf32, #tpu.memory_space<vmem>>, vector<16x2xf32>,
    %c0_15 = arith.constant 0 : index
    %c0_16 = arith.constant 0 : index
    %213 = vector.load %arg7[%c0_15, %c0_16] : memref<2x4xf32, #tpu.memory_space<vmem>>, vector<2x4xf32>
    tpu.vector_store %arg7[%c0_15, %c0_16], %196 {strides = array<i32>} : memref<2x4xf32, #tpu.memory_space<vmem>>, vector<2x4xf32>,
    return
  }
}

</mosaic_0001>

<llo_original>
// kernel: my_rnn_forward.1
$region0: #{my_rnn_forward.1}
  #allocation0 [shape = 'u32[]', space=smem, size = 0x4, offset = 0x4, fixed_abs, tag = 'smem constant byte address 0x4 - core index']
  #allocation1 [shape = 'u32[72,128]{1,0:T(1,128)}', space=vmem, size = 0x9000, scoped, tag = 'internal scratch']
  %s0 = inlined_call_operand.vmem [shape: f32[16,6], index: 0, kind: input, shape index: {}]
  %s1 = inlined_call_operand.vmem [shape: f32[4,4], index: 1, kind: input, shape index: {}]
  %s2 = inlined_call_operand.vmem [shape: f32[6,4], index: 2, kind: input, shape index: {}]
  %s3 = inlined_call_operand.vmem [shape: f32[1,4], index: 3, kind: input, shape index: {}]
  %s4 = inlined_call_operand.vmem [shape: f32[4,2], index: 4, kind: input, shape index: {}]
  %s5 = inlined_call_operand.vmem [shape: f32[1,2], index: 5, kind: input, shape index: {}]
  %s6 = inlined_call_operand.vmem [shape: f32[16,2], index: 6, kind: output, shape index: {0}]
  %s7 = inlined_call_operand.hbm [shape: f32[2,4], index: 7, kind: output, shape index: {1}]
  %8 = xla_tuple %s6, %s7
  %s9 = sld [smem:[#allocation0]]
  $region42: #{my_rnn_forward.1} parent=0
    _
  %s11 = ssub.s32 1, %s9
  %s12 = scalar_select 0, %s11, %s9
  $region1: #{my_rnn_forward.1} parent=0
    #allocation2 [shape = 'u8[1024]{0}', space=vmem, size = 0x400, scoped, tag = 'output window, operand 1, single buffered']
    #allocation3 [shape = 's32[1]{0}', space=sflag, size = 0x4, scoped, tag = 'scoped memory for my_rnn_forward.1']
    %13 = vsyncpa [#allocation3], 0
    // Predicated region
    $region2: #{my_rnn_forward.1} parent=1 // pred_check
      _
    $region3: #{my_rnn_forward.1} parent=1 // pred_check_branch
      %15 = sbr.rel (0) target = $region5
    $region4: #{my_rnn_forward.1} parent=1 // pred_region
      _
    $region5: #{my_rnn_forward.1} parent=1 // pred_fallthru
      _
    // Predicated region
    $region6: #{my_rnn_forward.1} parent=1 // pred_check
      _
    $region7: #{my_rnn_forward.1} parent=1 // pred_check_branch
      %17 = sbr.rel (0) target = $region9
    $region8: #{my_rnn_forward.1} parent=1 // pred_region
      _
    $region9: #{my_rnn_forward.1} parent=1 // pred_fallthru
      _
    // Predicated region
    $region10: #{my_rnn_forward.1} parent=1 // pred_check
      _
    $region11: #{my_rnn_forward.1} parent=1 // pred_check_branch
      %19 = sbr.rel (0) target = $region13
    $region12: #{my_rnn_forward.1} parent=1 // pred_region
      _
    $region13: #{my_rnn_forward.1} parent=1 // pred_fallthru
      _
    // Predicated region
    $region14: #{my_rnn_forward.1} parent=1 // pred_check
      _
    $region15: #{my_rnn_forward.1} parent=1 // pred_check_branch
      %21 = sbr.rel (0) target = $region17
    $region16: #{my_rnn_forward.1} parent=1 // pred_region
      _
    $region17: #{my_rnn_forward.1} parent=1 // pred_fallthru
      _
    // Predicated region
    $region18: #{my_rnn_forward.1} parent=1 // pred_check
      _
    $region19: #{my_rnn_forward.1} parent=1 // pred_check_branch
      %23 = sbr.rel (0) target = $region21
    $region20: #{my_rnn_forward.1} parent=1 // pred_region
      _
    $region21: #{my_rnn_forward.1} parent=1 // pred_fallthru
      _
    // Predicated region
    $region22: #{my_rnn_forward.1} parent=1 // pred_check
      _
    $region23: #{my_rnn_forward.1} parent=1 // pred_check_branch
      %25 = sbr.rel (0) target = $region25
    $region24: #{my_rnn_forward.1} parent=1 // pred_region
      _
    $region25: #{my_rnn_forward.1} parent=1 // pred_fallthru
      _
    %v26 = vld [vmem:[%s0] sm:$0xff]
    %v27 = vld [vmem:[%s0 + $0x8] sm:$0xff]
    %v28 = vld [vmem:[%s2] sm:$0x3f]
    %v29 = vld [vmem:[%s3] sm:$0x1]
    %v31 = vperm.slane %v29, 0
    %vm33 = vcmask 48128
    %v35 = vsel %vm33, %v26, 0
    %v38 = vsel %vm33, %v27, 0
    %vm40 = vcmask 1045504
    %v42 = vsel %vm40, %v28, 0
    %44 = vmatpush.msra.mxu0 0.0
    %45 = vmatpush.msra.mxu0 0.0
    %46 = vmatpush.msra.mxu0 0.0
    %47 = vmatpush.msra.mxu0 0.0
    %48 = vmatpush.msra.mxu0 0.0
    %49 = vmatpush.msra.mxu0 0.0
    %50 = vmatpush.msra.mxu0 0.0
    %51 = vmatpush.msra.mxu0 0.0
    %52 = vmatpush.msra.mxu0 0.0
    %53 = vmatpush.msra.mxu0 0.0
    %54 = vmatpush.msra.mxu0 0.0
    %55 = vmatpush.msra.mxu0 0.0
    %56 = vmatpush.msra.mxu0 0.0
    %57 = vmatpush.msra.mxu0 0.0
    %58 = vmatpush.msra.mxu0 0.0
    %59 = vmatpush.msra.mxu0 %v42
    %60 = vmatmul.f32.gmra.mxu0 %v35
    %v61 = vpop.f32.mrf.mxu0
    %v62 = vadd.f32 %v31, %v61
    %63 = vmatmul.f32.gmra.mxu0 %v38
    %v64 = vpop.f32.mrf.mxu0
    %v65 = vadd.f32 %v31, %v64
    %66 = vdwg.mxu0
    %v67 = vld [vmem:[%s1] sm:$0xf]
    %v68 = vperm.slane %v67, 0
    %v69 = vmul.f32 %v68, 0.0
    %v70 = vadd.f32 %v62, %v69
    %v71 = vadd.f32 %v65, %v69
    %v72 = vperm.slane %v67, 1
    %v73 = vmul.f32 %v72, 0.0
    %v74 = vadd.f32 %v70, %v73
    %v75 = vadd.f32 %v71, %v73
    %v76 = vperm.slane %v67, 2
    %v77 = vmul.f32 %v76, 0.0
    %v78 = vadd.f32 %v74, %v77
    %v79 = vadd.f32 %v75, %v77
    %v80 = vperm.slane %v67, 3
    %v81 = vmul.f32 %v80, 0.0
    %v82 = vadd.f32 %v78, %v81
    %v83 = vadd.f32 %v79, %v81
    %v84 = vtanh.pop %v82
    %v85 = vtanh.pop %v83
    %87 = vset.pattern.permute.xlu0 0
    %88 = vperm.xlu0 %87, %v84
    %v89 = vpop.permute.xlu0 %88
    %92 = vset.pattern.permute.xlu0 0
    %93 = vperm.xlu0 %92, %v85
    %v94 = vpop.permute.xlu0 %93
    %v96 = vmul.f32 %v89, %v68
    %v97 = vmul.f32 %v94, %v68
    %v100 = vrot.slane %v96, 7
    %v101 = vrot.slane %v97, 7
    %v104 = vadd.f32 %v62, %v100
    %v105 = vadd.f32 %v65, %v101
    %106 = vset.pattern.permute.xlu0 1
    %107 = vperm.xlu0 %106, %v84
    %v108 = vpop.permute.xlu0 %107
    %110 = vset.pattern.permute.xlu0 1
    %111 = vperm.xlu0 %110, %v85
    %v112 = vpop.permute.xlu0 %111
    %v114 = vmul.f32 %v108, %v72
    %v115 = vmul.f32 %v112, %v72
    %v118 = vrot.slane %v114, 7
    %v119 = vrot.slane %v115, 7
    %v122 = vadd.f32 %v104, %v118
    %v123 = vadd.f32 %v105, %v119
    %124 = vset.pattern.permute.xlu0 2
    %125 = vperm.xlu0 %124, %v84
    %v126 = vpop.permute.xlu0 %125
    %128 = vset.pattern.permute.xlu0 2
    %129 = vperm.xlu0 %128, %v85
    %v130 = vpop.permute.xlu0 %129
    %v132 = vmul.f32 %v126, %v76
    %v133 = vmul.f32 %v130, %v76
    %v136 = vrot.slane %v132, 7
    %v137 = vrot.slane %v133, 7
    %v140 = vadd.f32 %v122, %v136
    %v141 = vadd.f32 %v123, %v137
    %142 = vset.pattern.permute.xlu0 3
    %143 = vperm.xlu0 %142, %v84
    %v144 = vpop.permute.xlu0 %143
    %146 = vset.pattern.permute.xlu0 3
    %147 = vperm.xlu0 %146, %v85
    %v148 = vpop.permute.xlu0 %147
    %v150 = vmul.f32 %v144, %v80
    %v151 = vmul.f32 %v148, %v80
    %v154 = vrot.slane %v150, 7
    %v155 = vrot.slane %v151, 7
    %v158 = vadd.f32 %v140, %v154
    %v159 = vadd.f32 %v141, %v155
    %v160 = vtanh.pop %v158
    %v161 = vtanh.pop %v159
    %163 = vset.pattern.permute.xlu0 0
    %164 = vperm.xlu0 %163, %v160
    %v165 = vpop.permute.xlu0 %164
    %168 = vset.pattern.permute.xlu0 0
    %169 = vperm.xlu0 %168, %v161
    %v170 = vpop.permute.xlu0 %169
    %v172 = vmul.f32 %v165, %v68
    %v173 = vmul.f32 %v170, %v68
    %v176 = vrot.slane %v172, 7
    %v177 = vrot.slane %v173, 7
    %v180 = vadd.f32 %v62, %v176
    %v181 = vadd.f32 %v65, %v177
    %182 = vset.pattern.permute.xlu0 1
    %183 = vperm.xlu0 %182, %v160
    %v184 = vpop.permute.xlu0 %183
    %186 = vset.pattern.permute.xlu0 1
    %187 = vperm.xlu0 %186, %v161
    %v188 = vpop.permute.xlu0 %187
    %v190 = vmul.f32 %v184, %v72
    %v191 = vmul.f32 %v188, %v72
    %v194 = vrot.slane %v190, 7
    %v195 = vrot.slane %v191, 7
    %v198 = vadd.f32 %v180, %v194
    %v199 = vadd.f32 %v181, %v195
    %200 = vset.pattern.permute.xlu0 2
    %201 = vperm.xlu0 %200, %v160
    %v202 = vpop.permute.xlu0 %201
    %204 = vset.pattern.permute.xlu0 2
    %205 = vperm.xlu0 %204, %v161
    %v206 = vpop.permute.xlu0 %205
    %v208 = vmul.f32 %v202, %v76
    %v209 = vmul.f32 %v206, %v76
    %v212 = vrot.slane %v208, 7
    %v213 = vrot.slane %v209, 7
    %v216 = vadd.f32 %v198, %v212
    %v217 = vadd.f32 %v199, %v213
    %218 = vset.pattern.permute.xlu0 3
    %219 = vperm.xlu0 %218, %v160
    %v220 = vpop.permute.xlu0 %219
    %222 = vset.pattern.permute.xlu0 3
    %223 = vperm.xlu0 %222, %v161
    %v224 = vpop.permute.xlu0 %223
    %v226 = vmul.f32 %v220, %v80
    %v227 = vmul.f32 %v224, %v80
    %v230 = vrot.slane %v226, 7
    %v231 = vrot.slane %v227, 7
    %v234 = vadd.f32 %v216, %v230
    %v235 = vadd.f32 %v217, %v231
    %v236 = vtanh.pop %v234
    %v237 = vtanh.pop %v235
    %239 = vset.pattern.permute.xlu0 0
    %240 = vperm.xlu0 %239, %v236
    %v241 = vpop.permute.xlu0 %240
    %244 = vset.pattern.permute.xlu0 0
    %245 = vperm.xlu0 %244, %v237
    %v246 = vpop.permute.xlu0 %245
    %v248 = vmul.f32 %v241, %v68
    %v249 = vmul.f32 %v246, %v68
    %v252 = vrot.slane %v248, 7
    %v253 = vrot.slane %v249, 7
    %v256 = vadd.f32 %v62, %v252
    %v257 = vadd.f32 %v65, %v253
    %258 = vset.pattern.permute.xlu0 1
    %259 = vperm.xlu0 %258, %v236
    %v260 = vpop.permute.xlu0 %259
    %262 = vset.pattern.permute.xlu0 1
    %263 = vperm.xlu0 %262, %v237
    %v264 = vpop.permute.xlu0 %263
    %v266 = vmul.f32 %v260, %v72
    %v267 = vmul.f32 %v264, %v72
    %v270 = vrot.slane %v266, 7
    %v271 = vrot.slane %v267, 7
    %v274 = vadd.f32 %v256, %v270
    %v275 = vadd.f32 %v257, %v271
    %276 = vset.pattern.permute.xlu0 2
    %277 = vperm.xlu0 %276, %v236
    %v278 = vpop.permute.xlu0 %277
    %280 = vset.pattern.permute.xlu0 2
    %281 = vperm.xlu0 %280, %v237
    %v282 = vpop.permute.xlu0 %281
    %v284 = vmul.f32 %v278, %v76
    %v285 = vmul.f32 %v282, %v76
    %v288 = vrot.slane %v284, 7
    %v289 = vrot.slane %v285, 7
    %v292 = vadd.f32 %v274, %v288
    %v293 = vadd.f32 %v275, %v289
    %294 = vset.pattern.permute.xlu0 3
    %295 = vperm.xlu0 %294, %v236
    %v296 = vpop.permute.xlu0 %295
    %298 = vset.pattern.permute.xlu0 3
    %299 = vperm.xlu0 %298, %v237
    %v300 = vpop.permute.xlu0 %299
    %v302 = vmul.f32 %v296, %v80
    %v303 = vmul.f32 %v300, %v80
    %v306 = vrot.slane %v302, 7
    %v307 = vrot.slane %v303, 7
    %v310 = vadd.f32 %v292, %v306
    %v311 = vadd.f32 %v293, %v307
    %v312 = vtanh.pop %v310
    %v313 = vtanh.pop %v311
    %315 = vset.pattern.permute.xlu0 0
    %316 = vperm.xlu0 %315, %v312
    %v317 = vpop.permute.xlu0 %316
    %320 = vset.pattern.permute.xlu0 0
    %321 = vperm.xlu0 %320, %v313
    %v322 = vpop.permute.xlu0 %321
    %v324 = vmul.f32 %v317, %v68
    %v325 = vmul.f32 %v322, %v68
    %v328 = vrot.slane %v324, 7
    %v329 = vrot.slane %v325, 7
    %v332 = vadd.f32 %v62, %v328
    %v333 = vadd.f32 %v65, %v329
    %334 = vset.pattern.permute.xlu0 1
    %335 = vperm.xlu0 %334, %v312
    %v336 = vpop.permute.xlu0 %335
    %338 = vset.pattern.permute.xlu0 1
    %339 = vperm.xlu0 %338, %v313
    %v340 = vpop.permute.xlu0 %339
    %v342 = vmul.f32 %v336, %v72
    %v343 = vmul.f32 %v340, %v72
    %v346 = vrot.slane %v342, 7
    %v347 = vrot.slane %v343, 7
    %v350 = vadd.f32 %v332, %v346
    %v351 = vadd.f32 %v333, %v347
    %352 = vset.pattern.permute.xlu0 2
    %353 = vperm.xlu0 %352, %v312
    %v354 = vpop.permute.xlu0 %353
    %356 = vset.pattern.permute.xlu0 2
    %357 = vperm.xlu0 %356, %v313
    %v358 = vpop.permute.xlu0 %357
    %v360 = vmul.f32 %v354, %v76
    %v361 = vmul.f32 %v358, %v76
    %v364 = vrot.slane %v360, 7
    %v365 = vrot.slane %v361, 7
    %v368 = vadd.f32 %v350, %v364
    %v369 = vadd.f32 %v351, %v365
    %370 = vset.pattern.permute.xlu0 3
    %371 = vperm.xlu0 %370, %v312
    %v372 = vpop.permute.xlu0 %371
    %374 = vset.pattern.permute.xlu0 3
    %375 = vperm.xlu0 %374, %v313
    %v376 = vpop.permute.xlu0 %375
    %v378 = vmul.f32 %v372, %v80
    %v379 = vmul.f32 %v376, %v80
    %v382 = vrot.slane %v378, 7
    %v383 = vrot.slane %v379, 7
    %v386 = vadd.f32 %v368, %v382
    %v387 = vadd.f32 %v369, %v383
    %v388 = vtanh.pop %v386
    %v389 = vtanh.pop %v387
    %391 = vset.pattern.permute.xlu0 0
    %392 = vperm.xlu0 %391, %v388
    %v393 = vpop.permute.xlu0 %392
    %396 = vset.pattern.permute.xlu0 0
    %397 = vperm.xlu0 %396, %v389
    %v398 = vpop.permute.xlu0 %397
    %v400 = vmul.f32 %v393, %v68
    %v401 = vmul.f32 %v398, %v68
    %v404 = vrot.slane %v400, 7
    %v405 = vrot.slane %v401, 7
    %v408 = vadd.f32 %v62, %v404
    %v409 = vadd.f32 %v65, %v405
    %410 = vset.pattern.permute.xlu0 1
    %411 = vperm.xlu0 %410, %v388
    %v412 = vpop.permute.xlu0 %411
    %414 = vset.pattern.permute.xlu0 1
    %415 = vperm.xlu0 %414, %v389
    %v416 = vpop.permute.xlu0 %415
    %v418 = vmul.f32 %v412, %v72
    %v419 = vmul.f32 %v416, %v72
    %v422 = vrot.slane %v418, 7
    %v423 = vrot.slane %v419, 7
    %v426 = vadd.f32 %v408, %v422
    %v427 = vadd.f32 %v409, %v423
    %428 = vset.pattern.permute.xlu0 2
    %429 = vperm.xlu0 %428, %v388
    %v430 = vpop.permute.xlu0 %429
    %432 = vset.pattern.permute.xlu0 2
    %433 = vperm.xlu0 %432, %v389
    %v434 = vpop.permute.xlu0 %433
    %v436 = vmul.f32 %v430, %v76
    %v437 = vmul.f32 %v434, %v76
    %v440 = vrot.slane %v436, 7
    %v441 = vrot.slane %v437, 7
    %v444 = vadd.f32 %v426, %v440
    %v445 = vadd.f32 %v427, %v441
    %446 = vset.pattern.permute.xlu0 3
    %447 = vperm.xlu0 %446, %v388
    %v448 = vpop.permute.xlu0 %447
    %450 = vset.pattern.permute.xlu0 3
    %451 = vperm.xlu0 %450, %v389
    %v452 = vpop.permute.xlu0 %451
    %v454 = vmul.f32 %v448, %v80
    %v455 = vmul.f32 %v452, %v80
    %v458 = vrot.slane %v454, 7
    %v459 = vrot.slane %v455, 7
    %v462 = vadd.f32 %v444, %v458
    %v463 = vadd.f32 %v445, %v459
    %v464 = vtanh.pop %v462
    %v465 = vtanh.pop %v463
    %467 = vset.pattern.permute.xlu0 0
    %468 = vperm.xlu0 %467, %v464
    %v469 = vpop.permute.xlu0 %468
    %472 = vset.pattern.permute.xlu0 0
    %473 = vperm.xlu0 %472, %v465
    %v474 = vpop.permute.xlu0 %473
    %v476 = vmul.f32 %v469, %v68
    %v477 = vmul.f32 %v474, %v68
    %v480 = vrot.slane %v476, 7
    %v481 = vrot.slane %v477, 7
    %v484 = vadd.f32 %v62, %v480
    %v485 = vadd.f32 %v65, %v481
    %486 = vset.pattern.permute.xlu0 1
    %487 = vperm.xlu0 %486, %v464
    %v488 = vpop.permute.xlu0 %487
    %490 = vset.pattern.permute.xlu0 1
    %491 = vperm.xlu0 %490, %v465
    %v492 = vpop.permute.xlu0 %491
    %v494 = vmul.f32 %v488, %v72
    %v495 = vmul.f32 %v492, %v72
    %v498 = vrot.slane %v494, 7
    %v499 = vrot.slane %v495, 7
    %v502 = vadd.f32 %v484, %v498
    %v503 = vadd.f32 %v485, %v499
    %504 = vset.pattern.permute.xlu0 2
    %505 = vperm.xlu0 %504, %v464
    %v506 = vpop.permute.xlu0 %505
    %508 = vset.pattern.permute.xlu0 2
    %509 = vperm.xlu0 %508, %v465
    %v510 = vpop.permute.xlu0 %509
    %v512 = vmul.f32 %v506, %v76
    %v513 = vmul.f32 %v510, %v76
    %v516 = vrot.slane %v512, 7
    %v517 = vrot.slane %v513, 7
    %v520 = vadd.f32 %v502, %v516
    %v521 = vadd.f32 %v503, %v517
    %522 = vset.pattern.permute.xlu0 3
    %523 = vperm.xlu0 %522, %v464
    %v524 = vpop.permute.xlu0 %523
    %526 = vset.pattern.permute.xlu0 3
    %527 = vperm.xlu0 %526, %v465
    %v528 = vpop.permute.xlu0 %527
    %v530 = vmul.f32 %v524, %v80
    %v531 = vmul.f32 %v528, %v80
    %v534 = vrot.slane %v530, 7
    %v535 = vrot.slane %v531, 7
    %v538 = vadd.f32 %v520, %v534
    %v539 = vadd.f32 %v521, %v535
    %v540 = vtanh.pop %v538
    %v541 = vtanh.pop %v539
    %543 = vset.pattern.permute.xlu0 0
    %544 = vperm.xlu0 %543, %v540
    %v545 = vpop.permute.xlu0 %544
    %548 = vset.pattern.permute.xlu0 0
    %549 = vperm.xlu0 %548, %v541
    %v550 = vpop.permute.xlu0 %549
    %v552 = vmul.f32 %v545, %v68
    %v553 = vmul.f32 %v550, %v68
    %v556 = vrot.slane %v552, 7
    %v557 = vrot.slane %v553, 7
    %v560 = vadd.f32 %v62, %v556
    %v561 = vadd.f32 %v65, %v557
    %562 = vset.pattern.permute.xlu0 1
    %563 = vperm.xlu0 %562, %v540
    %v564 = vpop.permute.xlu0 %563
    %566 = vset.pattern.permute.xlu0 1
    %567 = vperm.xlu0 %566, %v541
    %v568 = vpop.permute.xlu0 %567
    %v570 = vmul.f32 %v564, %v72
    %v571 = vmul.f32 %v568, %v72
    %v574 = vrot.slane %v570, 7
    %v575 = vrot.slane %v571, 7
    %v578 = vadd.f32 %v560, %v574
    %v579 = vadd.f32 %v561, %v575
    %580 = vset.pattern.permute.xlu0 2
    %581 = vperm.xlu0 %580, %v540
    %v582 = vpop.permute.xlu0 %581
    %584 = vset.pattern.permute.xlu0 2
    %585 = vperm.xlu0 %584, %v541
    %v586 = vpop.permute.xlu0 %585
    %v588 = vmul.f32 %v582, %v76
    %v589 = vmul.f32 %v586, %v76
    %v592 = vrot.slane %v588, 7
    %v593 = vrot.slane %v589, 7
    %v596 = vadd.f32 %v578, %v592
    %v597 = vadd.f32 %v579, %v593
    %598 = vset.pattern.permute.xlu0 3
    %599 = vperm.xlu0 %598, %v540
    %v600 = vpop.permute.xlu0 %599
    %602 = vset.pattern.permute.xlu0 3
    %603 = vperm.xlu0 %602, %v541
    %v604 = vpop.permute.xlu0 %603
    %v606 = vmul.f32 %v600, %v80
    %v607 = vmul.f32 %v604, %v80
    %v610 = vrot.slane %v606, 7
    %v611 = vrot.slane %v607, 7
    %v614 = vadd.f32 %v596, %v610
    %v615 = vadd.f32 %v597, %v611
    %v616 = vtanh.pop %v614
    %v617 = vtanh.pop %v615
    %vm618 = vcmask 1040384
    %v619 = vsel %vm618, %v84, %v160
    %v620 = vsel %vm618, %v85, %v161
    %vm621 = vcmask 1041408
    %v622 = vsel %vm621, %v619, %v236
    %v623 = vsel %vm621, %v620, %v237
    %vm624 = vcmask 1042432
    %v625 = vsel %vm624, %v622, %v312
    %v626 = vsel %vm624, %v623, %v313
    %vm627 = vcmask 1043456
    %v628 = vsel %vm627, %v625, %v388
    %v629 = vsel %vm627, %v626, %v389
    %vm630 = vcmask 1044480
    %v631 = vsel %vm630, %v628, %v464
    %v632 = vsel %vm630, %v629, %v465
    %v633 = vsel %vm40, %v631, %v540
    %v634 = vsel %vm40, %v632, %v541
    %vm635 = vcmask 1046528
    %v636 = vsel %vm635, %v633, %v616
    %v637 = vsel %vm635, %v634, %v617
    %v638 = vld [vmem:[%s4] sm:$0xf]
    %v639 = vld [vmem:[%s5] sm:$0x1]
    %v641 = vperm.slane %v639, 0
    %vm643 = vcmask 31744
    %v645 = vsel %vm643, %v636, 0
    %v648 = vsel %vm643, %v637, 0
    %v651 = vsel %vm627, %v638, 0
    %653 = vmatpush.msra.mxu0 0.0
    %654 = vmatpush.msra.mxu0 0.0
    %655 = vmatpush.msra.mxu0 0.0
    %656 = vmatpush.msra.mxu0 0.0
    %657 = vmatpush.msra.mxu0 0.0
    %658 = vmatpush.msra.mxu0 0.0
    %659 = vmatpush.msra.mxu0 0.0
    %660 = vmatpush.msra.mxu0 0.0
    %661 = vmatpush.msra.mxu0 0.0
    %662 = vmatpush.msra.mxu0 0.0
    %663 = vmatpush.msra.mxu0 0.0
    %664 = vmatpush.msra.mxu0 0.0
    %665 = vmatpush.msra.mxu0 0.0
    %666 = vmatpush.msra.mxu0 0.0
    %667 = vmatpush.msra.mxu0 0.0
    %668 = vmatpush.msra.mxu0 %v651
    %669 = vmatmul.f32.gmra.mxu0 %v645
    %v670 = vpop.f32.mrf.mxu0
    %v671 = vadd.f32 %v641, %v670
    %672 = vmatmul.f32.gmra.mxu0 %v648
    %v673 = vpop.f32.mrf.mxu0
    %v674 = vadd.f32 %v641, %v673
    %675 = vdwg.mxu0
    %vm676 = vcmask 15360
    %677 = vst.msk [vmem:[%s6] sm:$0xff] %vm676, %v671
    %678 = vst.msk [vmem:[%s6 + $0x8] sm:$0xff] %vm676, %v674
    %v681 = vrot.slane %v617, 7
    %vm684 = vcmask 31751
    %685 = vst.msk [vmem:[#allocation2 - $0x7] sm:$0x80] %vm684, %v616
    %vm686 = vcmask 24576
    %687 = vst.msk [vmem:[#allocation2 + $0x1] sm:$0x1] %vm686, %v681
    // Predicated region
    $region26: #{my_rnn_forward.1} parent=1 // pred_check
      _
    $region27: #{my_rnn_forward.1} parent=1 // pred_check_branch
      %689 = sbr.rel (0) target = $region29
    $region28: #{my_rnn_forward.1} parent=1 // pred_region
      _
    $region29: #{my_rnn_forward.1} parent=1 // pred_fallthru
      _
    // Predicated region
    $region30: #{my_rnn_forward.1} parent=1 // pred_check
      _
    $region31: #{my_rnn_forward.1} parent=1 // pred_check_branch
      %691 = sbr.rel (0) target = $region33
    $region32: #{my_rnn_forward.1} parent=1 // pred_region
      %693 = vsyncadd [#allocation3], 0
      %s695 = sshll.u32 [#allocation2], 4
      %s696 = int_to_ptr.vmem [resolvable:$true] %s695
      %s697 = sshll.u32 %s7, 4
      %s698 = int_to_ptr.hbm [resolvable:$true] %s697
      %700 = dma.vmem_to_hbm [thread:$0]  %s696, 32, %s698, [#allocation3]
    $region33: #{my_rnn_forward.1} parent=1 // pred_fallthru
      _
    // Predicated region
    $region34: #{my_rnn_forward.1} parent=1 // pred_check
      _
    $region35: #{my_rnn_forward.1} parent=1 // pred_check_branch
      %702 = sbr.rel (0) target = $region37
    $region36: #{my_rnn_forward.1} parent=1 // pred_region
      _
    $region37: #{my_rnn_forward.1} parent=1 // pred_fallthru
      _
    // Predicated region
    $region38: #{my_rnn_forward.1} parent=1 // pred_check
      _
    $region39: #{my_rnn_forward.1} parent=1 // pred_check_branch
      %704 = sbr.rel (0) target = $region41
    $region40: #{my_rnn_forward.1} parent=1 // pred_region
      %706 = dma.done [#allocation3], 32
    $region41: #{my_rnn_forward.1} parent=1 // pred_fallthru
      _
    %707 = vsyncpa [#allocation3], 1

</llo_original>
